<compile_context>
chip_gen: v7x
topology: tpu7x:2x2x1
jax: 0.10.0
libtpu: 0.0.40
codegen_flags: <defaults>
</compile_context>

<pallas_src>
import jax
import jax.numpy as jnp
from jax.experimental import pallas as pl
from jax.experimental.pallas import tpu as pltpu

_LANE = 128
_MIN_TILE_HW = 512  # don't shrink the lane-dense tile below this (review #1)


def _rsi_kernel(x_ref, w_ref, b_ref, o_ref):
    # x_ref: (Bb, Cin, tile_hw)    w_ref: (doc_tile, Cin)
    # b_ref: (doc_tile, 1)         o_ref: (Bb, doc_tile, tile_hw)
    w = w_ref[...]
    b = b_ref[...]
    for i in range(x_ref.shape[0]):           # static unroll over small Bb
        y = jnp.dot(w, x_ref[i], preferred_element_type=jnp.float32)
        o_ref[i] = jnp.maximum(y + b, 0.0).astype(o_ref.dtype)


def _largest_doc_tile(doc, max_rows):
    """Largest multiple-of-8 divisor of `doc` that is <= max_rows (else doc)."""
    if doc <= max_rows:
        return doc
    t = (max_rows // 8) * 8
    while t >= 8:
        if doc % t == 0:
            return t
        t -= 8
    return doc  # no clean divisor; keep full rows and rely on vmem_limit_bytes


def recurrent_init_forward_lane_dense(x, weights, biases):
    """Lane-dense forward. x: (B, Cin, H, W); weights: list of (OC, Cin) or
    (OC, Cin, 1, 1); biases: list of (OC,). Returns (B, depth, OC, H, W)."""
    B, Cin, H, W = x.shape
    depth = len(weights)
    OC = weights[0].shape[0]
    DOC = depth * OC
    HW = H * W
    itemsize = jnp.dtype(x.dtype).itemsize

    # Fuse all depth 1x1 convs: rows ordered [d0 | d1 | ...] (depth-major).
    w_all = jnp.concatenate([w.reshape(OC, Cin) for w in weights], axis=0)
    w_all = w_all.astype(x.dtype)                                   # (DOC, Cin)
    b_all = jnp.concatenate([b.reshape(OC) for b in biases], axis=0)
    b_all = b_all.reshape(DOC, 1).astype(jnp.float32)               # (DOC, 1)

    # Channels stay put; flatten spatial -> lane-dense last dim.
    x_flat = x.reshape(B, Cin, HW)

    # ---- generation-aware VMEM budget (review: v7x has 64 MiB vs 128 MiB) ----
    try:
        vmem_cap = int(pltpu.get_tpu_info().vmem_capacity_bytes)
    except Exception:
        vmem_cap = 64 << 20
    out_block_target = (3 << 20) if vmem_cap <= (80 << 20) else (6 << 20)

    # ---- tile sizing: keep lanes wide, block DOC rows if needed ----
    hw_rounded = -(-HW // _LANE) * _LANE
    min_tile_hw = min(hw_rounded, _MIN_TILE_HW)
    max_doc_rows = max(8, (out_block_target // (min_tile_hw * itemsize)) // 8 * 8)
    doc_tile = _largest_doc_tile(DOC, max_doc_rows)
    n_doc = DOC // doc_tile if DOC % doc_tile == 0 else 1
    if n_doc == 1:
        doc_tile = DOC

    tile_hw_budget = max(_LANE, (out_block_target // (doc_tile * itemsize)) // _LANE * _LANE)
    tile_hw = max(min_tile_hw, min(hw_rounded, tile_hw_budget))
    n_t = -(-HW // tile_hw)
    HWp = n_t * tile_hw
    if HWp != HW:
        # Ragged spatial extent: pad (rare for power-of-2 images). Padded
        # columns compute relu(bias) but are sliced away before reshape.
        x_flat = jnp.pad(x_flat, ((0, 0), (0, 0), (0, HWp - HW)))

    # ---- batch blocking when the grid would be overhead-bound ----
    Bb = 1
    if B * n_doc * n_t < 8 and B > 1:
        for cand in range(B, 1, -1):
            if (B % cand == 0
                    and (B // cand) * n_doc * n_t >= 2       # keep 2 TCs busy (v7x)
                    and cand * doc_tile * tile_hw * itemsize <= 2 * out_block_target):
                Bb = cand
                break
    n_b = B // Bb

    # ---- compiler params: only raise vmem_limit_bytes when actually needed ----
    in_blk = Bb * Cin * tile_hw * itemsize
    out_blk = Bb * doc_tile * tile_hw * itemsize
    w_blk = doc_tile * Cin * itemsize
    b_blk = doc_tile * 1 * 4
    need = 2 * (in_blk + out_blk + w_blk + b_blk)        # double-buffered set
    cparams = dict(dimension_semantics=("parallel", "parallel", "parallel"))
    if need > (12 << 20):                                # v5e scoped default is 16 MiB
        cparams["vmem_limit_bytes"] = int(min(2 * need, vmem_cap * 3 // 4))
    compiler_params = pltpu.CompilerParams(**cparams)

    cost = pl.CostEstimate(
        flops=int(2 * B * DOC * Cin * HWp),
        transcendentals=0,
        bytes_accessed=int(itemsize * (B * Cin * HWp + DOC * Cin + DOC + B * DOC * HWp)),
    )

    out_flat = pl.pallas_call(
        _rsi_kernel,
        out_shape=jax.ShapeDtypeStruct((B, DOC, HWp), x.dtype),
        grid=(n_b, n_doc, n_t),
        in_specs=[
            pl.BlockSpec((Bb, Cin, tile_hw), lambda b, d, t: (b, 0, t)),
            pl.BlockSpec((doc_tile, Cin), lambda b, d, t: (d, 0)),
            pl.BlockSpec((doc_tile, 1), lambda b, d, t: (d, 0)),
        ],
        out_specs=pl.BlockSpec((Bb, doc_tile, tile_hw), lambda b, d, t: (b, d, t)),
        compiler_params=compiler_params,
        cost_estimate=cost,
    )(x_flat, w_all, b_all)

    # Free (view-like) reshape of the kernel's lane-dense output.
    return out_flat[:, :, :HW].reshape(B, depth, OC, H, W)


def recurrent_init_forward(x, weights, biases):
    """PyTorch-layout forward: (B, Cin, H, W) -> (B, OC, H, W, depth).

    The final transpose is a thin epilogue; run this under jax.jit so XLA
    fuses the slice+reshape+transpose into a single output pass (or use
    recurrent_init_forward_lane_dense and adapt the consumer to skip it)."""
    out = recurrent_init_forward_lane_dense(x, weights, biases)
    return jnp.transpose(out, (0, 2, 3, 4, 1))


def _reference(x, weights, biases):
    outs = []
    for w, b in zip(weights, biases):
        w2 = w.reshape(w.shape[0], -1)
        y = jnp.einsum('oc,bchw->bohw', w2, x) + b[None, :, None, None]
        outs.append(jnp.maximum(y, 0.0))
    return jnp.stack(outs, axis=-1)


if __name__ == "__main__":
    B, in_channels, H, W = 2, 4, 16, 16
    out_channels, depth = 32, 4

    key = jax.random.PRNGKey(0)
    kx, *kp = jax.random.split(key, 1 + 2 * depth)
    x = jax.random.normal(kx, (B, in_channels, H, W), dtype=jnp.float32)
    weights = [jax.random.normal(kp[2 * d], (out_channels, in_channels),
                                 dtype=jnp.float32) * 0.1 for d in range(depth)]
    biases = [jax.random.normal(kp[2 * d + 1], (out_channels,),
                                dtype=jnp.float32) * 0.1 for d in range(depth)]

    fwd = jax.jit(recurrent_init_forward)
    out = fwd(x, weights, biases)
    jax.block_until_ready(out)

    ref = _reference(x, weights, biases)
    assert out.shape == (B, out_channels, H, W, depth)
    assert jnp.allclose(out, ref, atol=1e-5, rtol=1e-5)

    print("KERNEL_OK")
</pallas_src>

<mosaic_0001>
module attributes {stable_mosaic.version = 11 : i64} {
  func.func @_rsi_kernel(%arg0: i32, %arg1: i32, %arg2: i32, %arg3: memref<1x4x256xf32, #tpu.memory_space<vmem>>, %arg4: memref<128x4xf32, #tpu.memory_space<vmem>>, %arg5: memref<128x1xf32, #tpu.memory_space<vmem>>, %arg6: memref<1x128x256xf32, #tpu.memory_space<vmem>>) attributes {dimension_semantics = [#tpu.dimension_semantics<parallel>, #tpu.dimension_semantics<parallel>, #tpu.dimension_semantics<parallel>], iteration_bounds = array<i64: 2, 1, 1>, scalar_prefetch = 0 : i64, scratch_operands = 0 : i64, tpu.core_type = #tpu.core_type<tc>, window_params = [{transform_indices = @transform_0, window_bounds = array<i64: 1, 4, 256>}, {transform_indices = @transform_1, window_bounds = array<i64: 128, 4>}, {transform_indices = @transform_2, window_bounds = array<i64: 128, 1>}, {transform_indices = @transform_3, window_bounds = array<i64: 1, 128, 256>}]} {
    %c0 = arith.constant 0 : index
    %c0_0 = arith.constant 0 : index
    %0 = vector.load %arg4[%c0, %c0_0] : memref<128x4xf32, #tpu.memory_space<vmem>>, vector<128x4xf32>
    %c0_1 = arith.constant 0 : index
    %c0_2 = arith.constant 0 : index
    %1 = vector.load %arg5[%c0_1, %c0_2] : memref<128x1xf32, #tpu.memory_space<vmem>>, vector<128x1xf32>
    %c0_3 = arith.constant 0 : index
    %c0_4 = arith.constant 0 : index
    %c0_5 = arith.constant 0 : index
    %2 = vector.load %arg3[%c0_3, %c0_4, %c0_5] : memref<1x4x256xf32, #tpu.memory_space<vmem>>, vector<1x4x256xf32>
    %3 = vector.shape_cast %2 : vector<1x4x256xf32> to vector<4x256xf32>
    %cst = arith.constant dense<0.000000e+00> : vector<128x256xf32>
    %4 = tpu.matmul %0, %3, %cst {dimension_numbers = #tpu.dot_dimension_numbers<[1], [0], [0], [1], [0, 0, 1, 1], [], []>} : vector<128x4xf32>, vector<4x256xf32>, vector<128x256xf32> -> vector<128x256xf32>
    %5 = vector.broadcast %1 : vector<128x1xf32> to vector<128x256xf32>
    %6 = arith.addf %4, %5 : vector<128x256xf32>
    %cst_6 = arith.constant 0.000000e+00 : f32
    %7 = vector.broadcast %cst_6 : f32 to vector<128x256xf32>
    %8 = arith.maximumf %6, %7 : vector<128x256xf32>
    %c0_7 = arith.constant 0 : index
    %c0_8 = arith.constant 0 : index
    %c0_9 = arith.constant 0 : index
    %9 = vector.load %arg6[%c0_7, %c0_8, %c0_9] : memref<1x128x256xf32, #tpu.memory_space<vmem>>, vector<1x128x256xf32>
    %10 = vector.shape_cast %9 : vector<1x128x256xf32> to vector<128x256xf32>
    %11 = vector.shape_cast %8 : vector<128x256xf32> to vector<1x128x256xf32>
    tpu.vector_store %arg6[%c0_7, %c0_8, %c0_9], %11 {strides = array<i32>} : memref<1x128x256xf32, #tpu.memory_space<vmem>>, vector<1x128x256xf32>,
    return
  }
  func.func @transform_0(%arg0: i32, %arg1: i32, %arg2: i32) -> (i32, i32, i32) {
    %c0_i32 = arith.constant 0 : i32
    %c0_i32_0 = arith.constant 0 : i32
    return %arg0, %c0_i32, %arg2 : i32, i32, i32
  }
  func.func @transform_1(%arg0: i32, %arg1: i32, %arg2: i32) -> (i32, i32) {
    %c0_i32 = arith.constant 0 : i32
    %c0_i32_0 = arith.constant 0 : i32
    return %arg1, %c0_i32 : i32, i32
  }
  func.func @transform_2(%arg0: i32, %arg1: i32, %arg2: i32) -> (i32, i32) {
    %c0_i32 = arith.constant 0 : i32
    %c0_i32_0 = arith.constant 0 : i32
    return %arg1, %c0_i32 : i32, i32
  }
  func.func @transform_3(%arg0: i32, %arg1: i32, %arg2: i32) -> (i32, i32, i32) {
    %c0_i32 = arith.constant 0 : i32
    return %arg0, %arg1, %arg2 : i32, i32, i32
  }
}

</mosaic_0001>

<llo_original>
// kernel: recurrent_init_forward.1
$region0: #{recurrent_init_forward.1}
  #allocation0 [shape = 'u32[]', space=smem, size = 0x4, offset = 0x4, fixed_abs, tag = 'smem constant byte address 0x4 - core index']
  #allocation1 [shape = 'u32[144,128]{1,0:T(1,128)}', space=vmem, size = 0x12000, scoped, tag = 'internal scratch']
  %s0 = inlined_call_operand.vmem [shape: f32[2,4,256], index: 0, kind: input, shape index: {}]
  %s1 = inlined_call_operand.vmem [shape: f32[128,4], index: 1, kind: input, shape index: {}]
  %s2 = inlined_call_operand.vmem [shape: f32[128,1], index: 2, kind: input, shape index: {}]
  %s3 = inlined_call_operand.vmem [shape: f32[2,128,256], index: 3, kind: output, shape index: {}]
  %s4 = sld [smem:[#allocation0]]
  $region45: #{recurrent_init_forward.1} parent=0
    _
  %s6 = ssub.s32 1, %s4
  %s7 = scalar_select 0, %s6, %s4
  loop: start=0, step=1, limit=4
  $region2: #{recurrent_init_forward.1} parent=0 // loop_pre_header
    _
  $region3: #{recurrent_init_forward.1} parent=0 // loop_header
    %s9 = sphi 0, %s13
    %p10 = scmp.ge.s32.totalorder %s9, 4
    %s16 = sphi 0, %s35
    %s17 = sphi 0, %s31
    %s18 = sphi 0, %s27
    %s19 = sphi 0, %s16
    %s20 = sphi 0, %s17
    %s21 = sphi 0, %s18
    %s22 = sphi 0, %s19
    %s23 = sphi 0, %s20
    %s24 = sphi 0, %s21
    %s40 = sphi 0, %s42
    %s43 = sphi 0, %s40
    %s44 = sphi 0, %s43
    %s60 = sphi 0, %s44
    %s66 = sphi 0, %s68
    %s69 = sphi 0, %s66
    %s70 = sphi 0, %s69
    %s86 = sphi 0, %s70
    %s92 = sphi 0, %s94
    %s95 = sphi 0, %s92
    %s96 = sphi 0, %s95
    %s112 = sphi 0, %s96
    %s122 = sphi 0, %s124
    %s125 = sphi 0, %s122
    %s126 = sphi 0, %s125
    %s142 = sphi 0, %s126
  $region4: #{recurrent_init_forward.1} parent=0 // loop_header_branch
    %12 = sbr.rel (%p10) target = $region8
  $region5: #{recurrent_init_forward.1} parent=0 // loop_body
    %s14 = ssub.s32 %s9, 1
    %s15 = ssub.s32 %s9, 2
    %s25 = sadd.s32 1, %s18
    %p26 = scmp.ge.s32.totalorder %s25, 1
    %s27 = scalar_select %p26, 0, %s25
    %s28 = sadd.s32 1, %s17
    %s29 = scalar_select %p26, %s28, %s17
    %p30 = scmp.ge.s32.totalorder %s29, 1
    %s31 = scalar_select %p30, 0, %s29
    %s32 = sadd.s32 1, %s16
    %s33 = scalar_select %p30, %s32, %s16
    %p34 = scmp.ge.s32.totalorder %s33, 2
    %s35 = scalar_select %p34, 0, %s33
    %s36 = ssub.s32 %s16, %s35
    %s37 = ssub.s32 %s18, %s27
    %s38 = sor.u32 %s36, %s37
    %p39 = scmp.eq.s32.totalorder %s38, 0
    %s41 = sadd.s32 %s40, 1
    %s42 = scalar_select %p39, %s40, %s41
    %p45 = pneg %p39
    %p46 = scmp.eq.s32.totalorder %s9, 1
    %p47 = por %p45, %p46
    %p48 = scmp.ne.s32.totalorder %s40, %s43
    %p49 = scmp.eq.s32.totalorder %s9, 0
    %p50 = por %p48, %p49
    %p51 = scmp.ne.s32.totalorder %s40, %s43
    %p52 = scmp.eq.s32.totalorder %s14, 1
    %p53 = por %p51, %p52
    %p54 = scmp.ne.s32.totalorder %s43, %s44
    %p55 = scmp.eq.s32.totalorder %s14, 0
    %p56 = por %p54, %p55
    %p57 = scmp.ne.s32.totalorder %s43, %s44
    %p58 = scmp.eq.s32.totalorder %s15, 1
    %p59 = por %p57, %p58
    %p61 = scmp.ne.s32.totalorder %s44, %s60
    %p62 = scmp.eq.s32.totalorder %s15, 0
    %p63 = por %p61, %p62
    %s64 = ssub.s32 %s17, %s31
    %p65 = scmp.eq.s32.totalorder %s64, 0
    %s67 = sadd.s32 %s66, 1
    %s68 = scalar_select %p65, %s66, %s67
    %p71 = pneg %p65
    %p72 = scmp.eq.s32.totalorder %s9, 1
    %p73 = por %p71, %p72
    %p74 = scmp.ne.s32.totalorder %s66, %s69
    %p75 = scmp.eq.s32.totalorder %s9, 0
    %p76 = por %p74, %p75
    %p77 = scmp.ne.s32.totalorder %s66, %s69
    %p78 = scmp.eq.s32.totalorder %s14, 1
    %p79 = por %p77, %p78
    %p80 = scmp.ne.s32.totalorder %s69, %s70
    %p81 = scmp.eq.s32.totalorder %s14, 0
    %p82 = por %p80, %p81
    %p83 = scmp.ne.s32.totalorder %s69, %s70
    %p84 = scmp.eq.s32.totalorder %s15, 1
    %p85 = por %p83, %p84
    %p87 = scmp.ne.s32.totalorder %s70, %s86
    %p88 = scmp.eq.s32.totalorder %s15, 0
    %p89 = por %p87, %p88
    %s90 = ssub.s32 %s17, %s31
    %p91 = scmp.eq.s32.totalorder %s90, 0
    %s93 = sadd.s32 %s92, 1
    %s94 = scalar_select %p91, %s92, %s93
    %p97 = pneg %p91
    %p98 = scmp.eq.s32.totalorder %s9, 1
    %p99 = por %p97, %p98
    %p100 = scmp.ne.s32.totalorder %s92, %s95
    %p101 = scmp.eq.s32.totalorder %s9, 0
    %p102 = por %p100, %p101
    %p103 = scmp.ne.s32.totalorder %s92, %s95
    %p104 = scmp.eq.s32.totalorder %s14, 1
    %p105 = por %p103, %p104
    %p106 = scmp.ne.s32.totalorder %s95, %s96
    %p107 = scmp.eq.s32.totalorder %s14, 0
    %p108 = por %p106, %p107
    %p109 = scmp.ne.s32.totalorder %s95, %s96
    %p110 = scmp.eq.s32.totalorder %s15, 1
    %p111 = por %p109, %p110
    %p113 = scmp.ne.s32.totalorder %s96, %s112
    %p114 = scmp.eq.s32.totalorder %s15, 0
    %p115 = por %p113, %p114
    %s116 = ssub.s32 %s16, %s35
    %s117 = ssub.s32 %s17, %s31
    %s118 = sor.u32 %s116, %s117
    %s119 = ssub.s32 %s18, %s27
    %s120 = sor.u32 %s118, %s119
    %p121 = scmp.eq.s32.totalorder %s120, 0
    %s123 = sadd.s32 %s122, 1
    %s124 = scalar_select %p121, %s122, %s123
    %p127 = pneg %p121
    %p128 = scmp.eq.s32.totalorder %s9, 1
    %p129 = por %p127, %p128
    %p130 = scmp.ne.s32.totalorder %s122, %s125
    %p131 = scmp.eq.s32.totalorder %s9, 0
    %p132 = por %p130, %p131
    %p133 = scmp.ne.s32.totalorder %s122, %s125
    %p134 = scmp.eq.s32.totalorder %s14, 1
    %p135 = por %p133, %p134
    %p136 = scmp.ne.s32.totalorder %s125, %s126
    %p137 = scmp.eq.s32.totalorder %s14, 0
    %p138 = por %p136, %p137
    %p139 = scmp.ne.s32.totalorder %s125, %s126
    %p140 = scmp.eq.s32.totalorder %s15, 1
    %p141 = por %p139, %p140
    %p143 = scmp.ne.s32.totalorder %s126, %s142
    %p144 = scmp.eq.s32.totalorder %s15, 0
    %p145 = por %p143, %p144
    %p146 = scmp.le.s32.totalorder 1, %s9
    %p147 = scmp.lt.s32.totalorder %s9, 3
    %p148 = pnand %p146, %p147
    %p149 = pneg %p148
    // Predicated region
    $region9: #{recurrent_init_forward.1} parent=5 // pred_check
      _
    $region10: #{recurrent_init_forward.1} parent=5 // pred_check_branch
      %151 = sbr.rel (%p148) target = $region12
    $region11: #{recurrent_init_forward.1} parent=5 // pred_region
      %s152 = ssub.s32 %s9, 1
      // Predicated region
      $region13: #{recurrent_init_forward.1} parent=11 // pred_check
        %p153 = pneg %p82
      $region14: #{recurrent_init_forward.1} parent=11 // pred_check_branch
        %155 = sbr.rel (%p153) target = $region16
      $region15: #{recurrent_init_forward.1} parent=11 // pred_region
        %s156 = smul.u32 16, %s20
        %p157 = scmp.lt.s32.totalorder %s156, 15
        %s158 = scalar_select %p157, %s156, 15
        %s159 = smul.addr %s158, 8
        %s160 = scalar_lea.vmem %s1, %s159
        %s161 = smul.u32 16, %s20
      $region16: #{recurrent_init_forward.1} parent=11 // pred_fallthru
        _
      // Predicated region
      $region17: #{recurrent_init_forward.1} parent=11 // pred_check
        %p162 = pneg %p108
      $region18: #{recurrent_init_forward.1} parent=11 // pred_check_branch
        %164 = sbr.rel (%p162) target = $region20
      $region19: #{recurrent_init_forward.1} parent=11 // pred_region
        %s165 = smul.u32 16, %s20
        %p166 = scmp.lt.s32.totalorder %s165, 15
        %s167 = scalar_select %p166, %s165, 15
        %s168 = smul.addr %s167, 8
        %s169 = scalar_lea.vmem %s2, %s168
        %s170 = smul.u32 16, %s20
      $region20: #{recurrent_init_forward.1} parent=11 // pred_fallthru
        _
    $region12: #{recurrent_init_forward.1} parent=5 // pred_fallthru
      _
    %p171 = scmp.lt.s32.totalorder %s9, 2
    // Predicated region
    $region21: #{recurrent_init_forward.1} parent=5 // pred_check
      %p172 = pneg %p171
    $region22: #{recurrent_init_forward.1} parent=5 // pred_check_branch
      %174 = sbr.rel (%p172) target = $region24
    $region23: #{recurrent_init_forward.1} parent=5 // pred_region
      // Predicated region
      $region25: #{recurrent_init_forward.1} parent=23 // pred_check
        %p175 = pneg %p50
      $region26: #{recurrent_init_forward.1} parent=23 // pred_check_branch
        %177 = sbr.rel (%p175) target = $region28
      $region27: #{recurrent_init_forward.1} parent=23 // pred_region
        %s178 = smul.u32 2, %s18
        %p179 = scmp.lt.s32.totalorder %s16, 1
        %s180 = scalar_select %p179, %s16, 1
        %p181 = scmp.lt.s32.totalorder %s178, 1
        %s182 = scalar_select %p181, %s178, 1
        %s183 = smul.addr %s180, 2
        %s184 = sadd.s32 %s182, %s183
        %s185 = smul.addr %s184, 4
        %s186 = scalar_lea.vmem %s0, %s185
        %s187 = smul.u32 2, %s18
      $region28: #{recurrent_init_forward.1} parent=23 // pred_fallthru
        _
    $region24: #{recurrent_init_forward.1} parent=5 // pred_fallthru
      _
    %p188 = scmp.le.s32.totalorder 1, %s9
    %p189 = scmp.lt.s32.totalorder %s9, 3
    %p190 = pnand %p188, %p189
    %p191 = pneg %p190
    // Predicated region
    $region29: #{recurrent_init_forward.1} parent=5 // pred_check
      _
    $region30: #{recurrent_init_forward.1} parent=5 // pred_check_branch
      %193 = sbr.rel (%p190) target = $region32
    $region31: #{recurrent_init_forward.1} parent=5 // pred_region
      %s194 = ssub.s32 %s9, 1
      %s195 = smul.u32 2, %s21
      %p196 = scmp.lt.s32.totalorder %s19, 1
      %s197 = scalar_select %p196, %s19, 1
      %p198 = scmp.lt.s32.totalorder %s195, 1
      %s199 = scalar_select %p198, %s195, 1
      %s200 = smul.addr %s197, 2
      %s201 = sadd.s32 %s199, %s200
      %s202 = smul.addr %s201, 4
      %s203 = scalar_lea.vmem %s0, %s202
      %p204 = pneg %p56
      %p205 = pneg %p53
      %s206 = smul.u32 16, %s20
      %p207 = scmp.lt.s32.totalorder %s206, 15
      %s208 = scalar_select %p207, %s206, 15
      %s209 = smul.addr %s208, 8
      %s210 = scalar_lea.vmem %s1, %s209
      %p211 = pneg %p82
      %p212 = pneg %p79
      %s213 = smul.u32 16, %s20
      %p214 = scmp.lt.s32.totalorder %s213, 15
      %s215 = scalar_select %p214, %s213, 15
      %s216 = smul.addr %s215, 8
      %s217 = scalar_lea.vmem %s2, %s216
      %p218 = pneg %p108
      %p219 = pneg %p105
      %p220 = pneg %p138
      %p221 = pneg %p135
      %s222 = smul.u32 16, %s20
      %s223 = smul.u32 2, %s21
      %p224 = scmp.lt.s32.totalorder %s19, 1
      %s225 = scalar_select %p224, %s19, 1
      %p226 = scmp.lt.s32.totalorder %s222, 15
      %s227 = scalar_select %p226, %s222, 15
      %p228 = scmp.lt.s32.totalorder %s223, 1
      %s229 = scalar_select %p228, %s223, 1
      %s230 = smul.addr %s227, 2
      %s231 = sadd.s32 %s229, %s230
      %s232 = smul.addr %s225, 32
      %s233 = sadd.s32 %s231, %s232
      %s234 = smul.addr %s233, 8
      %s235 = scalar_lea.vmem %s3, %s234
      %s236 = smul.u32 2, %s21
      %p237 = scmp.lt.s32.totalorder %s19, 1
      %s238 = scalar_select %p237, %s19, 1
      %p239 = scmp.lt.s32.totalorder %s236, 1
      %s240 = scalar_select %p239, %s236, 1
      %s241 = smul.addr %s238, 2
      %s242 = sadd.s32 %s240, %s241
      %s243 = smul.addr %s242, 4
      %s244 = scalar_lea.vmem %s0, %s243
      %s245 = smul.u32 2, %s21
      %s246 = smul.u32 16, %s20
      %p247 = scmp.lt.s32.totalorder %s246, 15
      %s248 = scalar_select %p247, %s246, 15
      %s249 = smul.addr %s248, 8
      %s250 = scalar_lea.vmem %s1, %s249
      %s251 = smul.u32 16, %s20
      %s252 = smul.u32 16, %s20
      %p253 = scmp.lt.s32.totalorder %s252, 15
      %s254 = scalar_select %p253, %s252, 15
      %s255 = smul.addr %s254, 8
      %s256 = scalar_lea.vmem %s2, %s255
      %s257 = smul.u32 16, %s20
      %s258 = smul.u32 16, %s20
      %s259 = smul.u32 2, %s21
      %p260 = scmp.lt.s32.totalorder %s19, 1
      %s261 = scalar_select %p260, %s19, 1
      %p262 = scmp.lt.s32.totalorder %s258, 15
      %s263 = scalar_select %p262, %s258, 15
      %p264 = scmp.lt.s32.totalorder %s259, 1
      %s265 = scalar_select %p264, %s259, 1
      %s266 = smul.addr %s263, 2
      %s267 = sadd.s32 %s265, %s266
      %s268 = smul.addr %s261, 32
      %s269 = sadd.s32 %s267, %s268
      %s270 = smul.addr %s269, 8
      %s271 = scalar_lea.vmem %s3, %s270
      %s272 = smul.u32 16, %s20
      %s273 = smul.u32 2, %s21
      %v274 = vld [vmem:[%s250] sm:$0xff]
      %v275 = vld [vmem:[%s250 + $0x8] sm:$0xff]
      %v276 = vld [vmem:[%s250 + $0x10] sm:$0xff]
      %v277 = vld [vmem:[%s250 + $0x18] sm:$0xff]
      %v278 = vld [vmem:[%s250 + $0x20] sm:$0xff]
      %v279 = vld [vmem:[%s250 + $0x28] sm:$0xff]
      %v280 = vld [vmem:[%s250 + $0x30] sm:$0xff]
      %v281 = vld [vmem:[%s250 + $0x38] sm:$0xff]
      %v282 = vld [vmem:[%s250 + $0x40] sm:$0xff]
      %v283 = vld [vmem:[%s250 + $0x48] sm:$0xff]
      %v284 = vld [vmem:[%s250 + $0x50] sm:$0xff]
      %v285 = vld [vmem:[%s250 + $0x58] sm:$0xff]
      %v286 = vld [vmem:[%s250 + $0x60] sm:$0xff]
      %v287 = vld [vmem:[%s250 + $0x68] sm:$0xff]
      %v288 = vld [vmem:[%s250 + $0x70] sm:$0xff]
      %v289 = vld [vmem:[%s250 + $0x78] sm:$0xff]
      %v290 = vld [vmem:[%s256] sm:$0xff]
      %v291 = vld [vmem:[%s256 + $0x8] sm:$0xff]
      %v292 = vld [vmem:[%s256 + $0x10] sm:$0xff]
      %v293 = vld [vmem:[%s256 + $0x18] sm:$0xff]
      %v294 = vld [vmem:[%s256 + $0x20] sm:$0xff]
      %v295 = vld [vmem:[%s256 + $0x28] sm:$0xff]
      %v296 = vld [vmem:[%s256 + $0x30] sm:$0xff]
      %v297 = vld [vmem:[%s256 + $0x38] sm:$0xff]
      %v298 = vld [vmem:[%s256 + $0x40] sm:$0xff]
      %v299 = vld [vmem:[%s256 + $0x48] sm:$0xff]
      %v300 = vld [vmem:[%s256 + $0x50] sm:$0xff]
      %v301 = vld [vmem:[%s256 + $0x58] sm:$0xff]
      %v302 = vld [vmem:[%s256 + $0x60] sm:$0xff]
      %v303 = vld [vmem:[%s256 + $0x68] sm:$0xff]
      %v304 = vld [vmem:[%s256 + $0x70] sm:$0xff]
      %v305 = vld [vmem:[%s256 + $0x78] sm:$0xff]
      %v306 = vld [vmem:[%s244] sm:$0xff]
      %308 = vset.pattern.permute.xlu0 0
      %309 = vperm.xlu0 %308, %v290
      %v310 = vpop.permute.xlu0 %309
      %313 = vset.pattern.permute.xlu0 0
      %314 = vperm.xlu0 %313, %v291
      %v315 = vpop.permute.xlu0 %314
      %318 = vset.pattern.permute.xlu0 0
      %319 = vperm.xlu0 %318, %v292
      %v320 = vpop.permute.xlu0 %319
      %323 = vset.pattern.permute.xlu0 0
      %324 = vperm.xlu0 %323, %v293
      %v325 = vpop.permute.xlu0 %324
      %328 = vset.pattern.permute.xlu0 0
      %329 = vperm.xlu0 %328, %v294
      %v330 = vpop.permute.xlu0 %329
      %333 = vset.pattern.permute.xlu0 0
      %334 = vperm.xlu0 %333, %v295
      %v335 = vpop.permute.xlu0 %334
      %338 = vset.pattern.permute.xlu0 0
      %339 = vperm.xlu0 %338, %v296
      %v340 = vpop.permute.xlu0 %339
      %343 = vset.pattern.permute.xlu0 0
      %344 = vperm.xlu0 %343, %v297
      %v345 = vpop.permute.xlu0 %344
      %348 = vset.pattern.permute.xlu0 0
      %349 = vperm.xlu0 %348, %v298
      %v350 = vpop.permute.xlu0 %349
      %353 = vset.pattern.permute.xlu0 0
      %354 = vperm.xlu0 %353, %v299
      %v355 = vpop.permute.xlu0 %354
      %358 = vset.pattern.permute.xlu0 0
      %359 = vperm.xlu0 %358, %v300
      %v360 = vpop.permute.xlu0 %359
      %363 = vset.pattern.permute.xlu0 0
      %364 = vperm.xlu0 %363, %v301
      %v365 = vpop.permute.xlu0 %364
      %368 = vset.pattern.permute.xlu0 0
      %369 = vperm.xlu0 %368, %v302
      %v370 = vpop.permute.xlu0 %369
      %373 = vset.pattern.permute.xlu0 0
      %374 = vperm.xlu0 %373, %v303
      %v375 = vpop.permute.xlu0 %374
      %378 = vset.pattern.permute.xlu0 0
      %379 = vperm.xlu0 %378, %v304
      %v380 = vpop.permute.xlu0 %379
      %383 = vset.pattern.permute.xlu0 0
      %384 = vperm.xlu0 %383, %v305
      %v385 = vpop.permute.xlu0 %384
      %v388 = vcombine.high %v306, %v306
      %vm389 = vcmask 31744
      %v391 = vsel %vm389, %v274, 0
      %v394 = vsel %vm389, %v275, 0
      %v397 = vsel %vm389, %v276, 0
      %v400 = vsel %vm389, %v277, 0
      %v403 = vsel %vm389, %v278, 0
      %v406 = vsel %vm389, %v279, 0
      %v409 = vsel %vm389, %v280, 0
      %v412 = vsel %vm389, %v281, 0
      %v415 = vsel %vm389, %v282, 0
      %v418 = vsel %vm389, %v283, 0
      %v421 = vsel %vm389, %v284, 0
      %v424 = vsel %vm389, %v285, 0
      %v427 = vsel %vm389, %v286, 0
      %v430 = vsel %vm389, %v287, 0
      %v433 = vsel %vm389, %v288, 0
      %v436 = vsel %vm389, %v289, 0
      %vm438 = vcmask 1043456
      %v439 = vsel %vm438, %v306, 0
      %v441 = vsel %vm438, %v388, 0
      %443 = vmatprep.subr.mxu0 %v441
      %444 = vmatpush1.msra.mxu0 %v439
      %445 = vmatprep.subr.mxu0 0.0
      %446 = vmatpush1.msra.mxu0 0.0
      %447 = vmatprep.subr.mxu0 0.0
      %448 = vmatpush1.msra.mxu0 0.0
      %449 = vmatprep.subr.mxu0 0.0
      %450 = vmatpush1.msra.mxu0 0.0
      %451 = vmatprep.subr.mxu0 0.0
      %452 = vmatpush1.msra.mxu0 0.0
      %453 = vmatprep.subr.mxu0 0.0
      %454 = vmatpush1.msra.mxu0 0.0
      %455 = vmatprep.subr.mxu0 0.0
      %456 = vmatpush1.msra.mxu0 0.0
      %457 = vmatprep.subr.mxu0 0.0
      %458 = vmatpush1.msra.mxu0 0.0
      %459 = vmatprep.subr.mxu0 0.0
      %460 = vmatpush1.msra.mxu0 0.0
      %461 = vmatprep.subr.mxu0 0.0
      %462 = vmatpush1.msra.mxu0 0.0
      %463 = vmatprep.subr.mxu0 0.0
      %464 = vmatpush1.msra.mxu0 0.0
      %465 = vmatprep.subr.mxu0 0.0
      %466 = vmatpush1.msra.mxu0 0.0
      %467 = vmatprep.subr.mxu0 0.0
      %468 = vmatpush1.msra.mxu0 0.0
      %469 = vmatprep.subr.mxu0 0.0
      %470 = vmatpush1.msra.mxu0 0.0
      %471 = vmatprep.subr.mxu0 0.0
      %472 = vmatpush1.msra.mxu0 0.0
      %473 = vmatprep.subr.mxu0 0.0
      %474 = vmatpush1.msra.mxu0 0.0
      %475 = vmatprep.subr.mxu0 0.0
      %476 = vmatpush1.msra.mxu0 0.0
      %477 = vmatprep.subr.mxu0 0.0
      %478 = vmatpush1.msra.mxu0 0.0
      %479 = vmatprep.subr.mxu0 0.0
      %480 = vmatpush1.msra.mxu0 0.0
      %481 = vmatprep.subr.mxu0 0.0
      %482 = vmatpush1.msra.mxu0 0.0
      %483 = vmatprep.subr.mxu0 0.0
      %484 = vmatpush1.msra.mxu0 0.0
      %485 = vmatprep.subr.mxu0 0.0
      %486 = vmatpush1.msra.mxu0 0.0
      %487 = vmatprep.subr.mxu0 0.0
      %488 = vmatpush1.msra.mxu0 0.0
      %489 = vmatprep.subr.mxu0 0.0
      %490 = vmatpush1.msra.mxu0 0.0
      %491 = vmatprep.subr.mxu0 0.0
      %492 = vmatpush1.msra.mxu0 0.0
      %493 = vmatprep.subr.mxu0 0.0
      %494 = vmatpush1.msra.mxu0 0.0
      %495 = vmatprep.subr.mxu0 0.0
      %496 = vmatpush1.msra.mxu0 0.0
      %497 = vmatprep.subr.mxu0 0.0
      %498 = vmatpush1.msra.mxu0 0.0
      %499 = vmatprep.subr.mxu0 0.0
      %500 = vmatpush1.msra.mxu0 0.0
      %501 = vmatprep.subr.mxu0 0.0
      %502 = vmatpush1.msra.mxu0 0.0
      %503 = vmatprep.subr.mxu0 0.0
      %504 = vmatpush1.msra.mxu0 0.0
      %505 = vmatprep.subr.mxu0 0.0
      %506 = vmatpush1.msra.mxu0 0.0
      %507 = vmatprep.mubr.f32.mxu0 0.0
      %508 = vmatmul.mubr.f32.gmra.mrb[0].mxu0 %v391
      %v509 = vpop.f32.mrb[0].mxu0
      %v510 = vadd.f32 %v310, %v509
      %v511 = vpop.f32.mrb[0].mxu0
      %v512 = vadd.f32 %v310, %v511
      %513 = vmatprep.mubr.f32.mxu0 0.0
      %514 = vmatmul.mubr.f32.gmra.mrb[0].mxu0 %v394
      %v515 = vpop.f32.mrb[0].mxu0
      %v516 = vadd.f32 %v315, %v515
      %v517 = vpop.f32.mrb[0].mxu0
      %v518 = vadd.f32 %v315, %v517
      %519 = vmatprep.mubr.f32.mxu0 0.0
      %520 = vmatmul.mubr.f32.gmra.mrb[0].mxu0 %v397
      %v521 = vpop.f32.mrb[0].mxu0
      %v522 = vadd.f32 %v320, %v521
      %v523 = vpop.f32.mrb[0].mxu0
      %v524 = vadd.f32 %v320, %v523
      %525 = vmatprep.mubr.f32.mxu0 0.0
      %526 = vmatmul.mubr.f32.gmra.mrb[0].mxu0 %v400
      %v527 = vpop.f32.mrb[0].mxu0
      %v528 = vadd.f32 %v325, %v527
      %v529 = vpop.f32.mrb[0].mxu0
      %v530 = vadd.f32 %v325, %v529
      %531 = vmatprep.mubr.f32.mxu0 0.0
      %532 = vmatmul.mubr.f32.gmra.mrb[0].mxu0 %v403
      %v533 = vpop.f32.mrb[0].mxu0
      %v534 = vadd.f32 %v330, %v533
      %v535 = vpop.f32.mrb[0].mxu0
      %v536 = vadd.f32 %v330, %v535
      %537 = vmatprep.mubr.f32.mxu0 0.0
      %538 = vmatmul.mubr.f32.gmra.mrb[0].mxu0 %v406
      %v539 = vpop.f32.mrb[0].mxu0
      %v540 = vadd.f32 %v335, %v539
      %v541 = vpop.f32.mrb[0].mxu0
      %v542 = vadd.f32 %v335, %v541
      %543 = vmatprep.mubr.f32.mxu0 0.0
      %544 = vmatmul.mubr.f32.gmra.mrb[0].mxu0 %v409
      %v545 = vpop.f32.mrb[0].mxu0
      %v546 = vadd.f32 %v340, %v545
      %v547 = vpop.f32.mrb[0].mxu0
      %v548 = vadd.f32 %v340, %v547
      %549 = vmatprep.mubr.f32.mxu0 0.0
      %550 = vmatmul.mubr.f32.gmra.mrb[0].mxu0 %v412
      %v551 = vpop.f32.mrb[0].mxu0
      %v552 = vadd.f32 %v345, %v551
      %v553 = vpop.f32.mrb[0].mxu0
      %v554 = vadd.f32 %v345, %v553
      %555 = vmatprep.mubr.f32.mxu0 0.0
      %556 = vmatmul.mubr.f32.gmra.mrb[0].mxu0 %v415
      %v557 = vpop.f32.mrb[0].mxu0
      %v558 = vadd.f32 %v350, %v557
      %v559 = vpop.f32.mrb[0].mxu0
      %v560 = vadd.f32 %v350, %v559
      %561 = vmatprep.mubr.f32.mxu0 0.0
      %562 = vmatmul.mubr.f32.gmra.mrb[0].mxu0 %v418
      %v563 = vpop.f32.mrb[0].mxu0
      %v564 = vadd.f32 %v355, %v563
      %v565 = vpop.f32.mrb[0].mxu0
      %v566 = vadd.f32 %v355, %v565
      %567 = vmatprep.mubr.f32.mxu0 0.0
      %568 = vmatmul.mubr.f32.gmra.mrb[0].mxu0 %v421
      %v569 = vpop.f32.mrb[0].mxu0
      %v570 = vadd.f32 %v360, %v569
      %v571 = vpop.f32.mrb[0].mxu0
      %v572 = vadd.f32 %v360, %v571
      %573 = vmatprep.mubr.f32.mxu0 0.0
      %574 = vmatmul.mubr.f32.gmra.mrb[0].mxu0 %v424
      %v575 = vpop.f32.mrb[0].mxu0
      %v576 = vadd.f32 %v365, %v575
      %v577 = vpop.f32.mrb[0].mxu0
      %v578 = vadd.f32 %v365, %v577
      %579 = vmatprep.mubr.f32.mxu0 0.0
      %580 = vmatmul.mubr.f32.gmra.mrb[0].mxu0 %v427
      %v581 = vpop.f32.mrb[0].mxu0
      %v582 = vadd.f32 %v370, %v581
      %v583 = vpop.f32.mrb[0].mxu0
      %v584 = vadd.f32 %v370, %v583
      %585 = vmatprep.mubr.f32.mxu0 0.0
      %586 = vmatmul.mubr.f32.gmra.mrb[0].mxu0 %v430
      %v587 = vpop.f32.mrb[0].mxu0
      %v588 = vadd.f32 %v375, %v587
      %v589 = vpop.f32.mrb[0].mxu0
      %v590 = vadd.f32 %v375, %v589
      %591 = vmatprep.mubr.f32.mxu0 0.0
      %592 = vmatmul.mubr.f32.gmra.mrb[0].mxu0 %v433
      %v593 = vpop.f32.mrb[0].mxu0
      %v594 = vadd.f32 %v380, %v593
      %v595 = vpop.f32.mrb[0].mxu0
      %v596 = vadd.f32 %v380, %v595
      %597 = vmatprep.mubr.f32.mxu0 0.0
      %598 = vmatmul.mubr.f32.gmra.mrb[0].mxu0 %v436
      %v599 = vpop.f32.mrb[0].mxu0
      %v600 = vadd.f32 %v385, %v599
      %v601 = vpop.f32.mrb[0].mxu0
      %v602 = vadd.f32 %v385, %v601
      %603 = vdwg.mxu0
      %v604 = vmax.f32 %v510, 0.0
      %v605 = vmax.f32 %v512, 0.0
      %v606 = vmax.f32 %v516, 0.0
      %v607 = vmax.f32 %v518, 0.0
      %v608 = vmax.f32 %v522, 0.0
      %v609 = vmax.f32 %v524, 0.0
      %v610 = vmax.f32 %v528, 0.0
      %v611 = vmax.f32 %v530, 0.0
      %v612 = vmax.f32 %v534, 0.0
      %v613 = vmax.f32 %v536, 0.0
      %v614 = vmax.f32 %v540, 0.0
      %v615 = vmax.f32 %v542, 0.0
      %v616 = vmax.f32 %v546, 0.0
      %v617 = vmax.f32 %v548, 0.0
      %v618 = vmax.f32 %v552, 0.0
      %v619 = vmax.f32 %v554, 0.0
      %v620 = vmax.f32 %v558, 0.0
      %v621 = vmax.f32 %v560, 0.0
      %v622 = vmax.f32 %v564, 0.0
      %v623 = vmax.f32 %v566, 0.0
      %v624 = vmax.f32 %v570, 0.0
      %v625 = vmax.f32 %v572, 0.0
      %v626 = vmax.f32 %v576, 0.0
      %v627 = vmax.f32 %v578, 0.0
      %v628 = vmax.f32 %v582, 0.0
      %v629 = vmax.f32 %v584, 0.0
      %v630 = vmax.f32 %v588, 0.0
      %v631 = vmax.f32 %v590, 0.0
      %v632 = vmax.f32 %v594, 0.0
      %v633 = vmax.f32 %v596, 0.0
      %v634 = vmax.f32 %v600, 0.0
      %v635 = vmax.f32 %v602, 0.0
      %636 = vst [vmem:[%s271] sm:$0xff] %v604
      %637 = vst [vmem:[%s271 + $0x8] sm:$0xff] %v605
      %638 = vst [vmem:[%s271 + $0x10] sm:$0xff] %v606
      %639 = vst [vmem:[%s271 + $0x18] sm:$0xff] %v607
      %640 = vst [vmem:[%s271 + $0x20] sm:$0xff] %v608
      %641 = vst [vmem:[%s271 + $0x28] sm:$0xff] %v609
      %642 = vst [vmem:[%s271 + $0x30] sm:$0xff] %v610
      %643 = vst [vmem:[%s271 + $0x38] sm:$0xff] %v611
      %644 = vst [vmem:[%s271 + $0x40] sm:$0xff] %v612
      %645 = vst [vmem:[%s271 + $0x48] sm:$0xff] %v613
      %646 = vst [vmem:[%s271 + $0x50] sm:$0xff] %v614
      %647 = vst [vmem:[%s271 + $0x58] sm:$0xff] %v615
      %648 = vst [vmem:[%s271 + $0x60] sm:$0xff] %v616
      %649 = vst [vmem:[%s271 + $0x68] sm:$0xff] %v617
      %650 = vst [vmem:[%s271 + $0x70] sm:$0xff] %v618
      %651 = vst [vmem:[%s271 + $0x78] sm:$0xff] %v619
      %652 = vst [vmem:[%s271 + $0x80] sm:$0xff] %v620
      %653 = vst [vmem:[%s271 + $0x88] sm:$0xff] %v621
      %654 = vst [vmem:[%s271 + $0x90] sm:$0xff] %v622
      %655 = vst [vmem:[%s271 + $0x98] sm:$0xff] %v623
      %656 = vst [vmem:[%s271 + $0xa0] sm:$0xff] %v624
      %657 = vst [vmem:[%s271 + $0xa8] sm:$0xff] %v625
      %658 = vst [vmem:[%s271 + $0xb0] sm:$0xff] %v626
      %659 = vst [vmem:[%s271 + $0xb8] sm:$0xff] %v627
      %660 = vst [vmem:[%s271 + $0xc0] sm:$0xff] %v628
      %661 = vst [vmem:[%s271 + $0xc8] sm:$0xff] %v629
      %662 = vst [vmem:[%s271 + $0xd0] sm:$0xff] %v630
      %663 = vst [vmem:[%s271 + $0xd8] sm:$0xff] %v631
      %664 = vst [vmem:[%s271 + $0xe0] sm:$0xff] %v632
      %665 = vst [vmem:[%s271 + $0xe8] sm:$0xff] %v633
      %666 = vst [vmem:[%s271 + $0xf0] sm:$0xff] %v634
      %667 = vst [vmem:[%s271 + $0xf8] sm:$0xff] %v635
      %s668 = smul.u32 16, %s20
      %s669 = smul.u32 2, %s21
      %p670 = scmp.lt.s32.totalorder %s19, 1
      %s671 = scalar_select %p670, %s19, 1
      %p672 = scmp.lt.s32.totalorder %s668, 15
      %s673 = scalar_select %p672, %s668, 15
      %p674 = scmp.lt.s32.totalorder %s669, 1
      %s675 = scalar_select %p674, %s669, 1
      %s676 = smul.addr %s673, 2
      %s677 = sadd.s32 %s675, %s676
      %s678 = smul.addr %s671, 32
      %s679 = sadd.s32 %s677, %s678
      %s680 = smul.addr %s679, 8
      %s681 = scalar_lea.vmem %s3, %s680
      // Predicated region
      $region33: #{recurrent_init_forward.1} parent=31 // pred_check
        %p682 = pneg %p135
      $region34: #{recurrent_init_forward.1} parent=31 // pred_check_branch
        %684 = sbr.rel (%p682) target = $region36
      $region35: #{recurrent_init_forward.1} parent=31 // pred_region
        %s685 = smul.u32 16, %s20
        %s686 = smul.u32 2, %s21
      $region36: #{recurrent_init_forward.1} parent=31 // pred_fallthru
        _
    $region32: #{recurrent_init_forward.1} parent=5 // pred_fallthru
      _
    %p687 = scmp.le.s32.totalorder 2, %s9
    // Predicated region
    $region37: #{recurrent_init_forward.1} parent=5 // pred_check
      %p688 = pneg %p687
    $region38: #{recurrent_init_forward.1} parent=5 // pred_check_branch
      %690 = sbr.rel (%p688) target = $region40
    $region39: #{recurrent_init_forward.1} parent=5 // pred_region
      %s691 = ssub.s32 %s9, 2
      // Predicated region
      $region41: #{recurrent_init_forward.1} parent=39 // pred_check
        %p692 = pneg %p141
      $region42: #{recurrent_init_forward.1} parent=39 // pred_check_branch
        %694 = sbr.rel (%p692) target = $region44
      $region43: #{recurrent_init_forward.1} parent=39 // pred_region
        %s695 = smul.u32 16, %s23
        %s696 = smul.u32 2, %s24
        %p697 = scmp.lt.s32.totalorder %s22, 1
        %s698 = scalar_select %p697, %s22, 1
        %p699 = scmp.lt.s32.totalorder %s695, 15
        %s700 = scalar_select %p699, %s695, 15
        %p701 = scmp.lt.s32.totalorder %s696, 1
        %s702 = scalar_select %p701, %s696, 1
        %s703 = smul.addr %s700, 2
        %s704 = sadd.s32 %s702, %s703
        %s705 = smul.addr %s698, 32
        %s706 = sadd.s32 %s704, %s705
        %s707 = smul.addr %s706, 8
        %s708 = scalar_lea.vmem %s3, %s707
      $region44: #{recurrent_init_forward.1} parent=39 // pred_fallthru
        _
    $region40: #{recurrent_init_forward.1} parent=5 // pred_fallthru
      _
  $region6: #{recurrent_init_forward.1} parent=0 // loop_footer
    %s13 = sadd.s32 1, %s9
  $region7: #{recurrent_init_forward.1} parent=0 // loop_footer_branch
    %8 = sbr.rel target = $region3
  $region8: #{recurrent_init_forward.1} parent=0 // loop_exit
    _

</llo_original>
